<compile_context>
chip_gen: v7x
topology: tpu7x:2x2x1
jax: 0.10.0
libtpu: 0.0.40
codegen_flags: <defaults>
</compile_context>

<pallas_src>
import functools

import jax
import jax.numpy as jnp
from jax.experimental import pallas as pl
from jax.experimental.pallas import tpu as pltpu


def _zoom_cat_kernel(l_ref, m_ref, s_ref, o_ref, *, ntaps, cl, cm):
    """One (batch, row-tile) grid step.  NCHW blocks, W on the lane axis.

    l_ref: (1, ntaps, Cl, TH, Wm)   pooling-window taps on a leading axis
    m_ref: (1, Cm, TH, Wm)
    s_ref: (1, Cs, TH, Wm)          already nearest-replicated to (Hm, Wm)
    o_ref: (1, Cl+Cm+Cs, TH, Wm)
    """
    t0 = l_ref[0, 0].astype(jnp.float32)
    pmax = t0
    psum = t0
    for t in range(1, ntaps):                      # static unroll over window taps
        v = l_ref[0, t].astype(jnp.float32)
        pmax = jnp.maximum(pmax, v)
        psum = psum + v
    pooled = pmax + psum * (1.0 / ntaps)           # adaptive max-pool + avg-pool

    # Channel-concatenated write: disjoint channel ranges of one output slab.
    o_ref[0, :cl] = pooled.astype(o_ref.dtype)
    o_ref[0, cl:cl + cm] = m_ref[0]
    o_ref[0, cl + cm:] = s_ref[0]


def zoom_cat(l, m, s, *, tile_h=None):
    """Pallas implementation of Zoom_cat.forward([l, m, s]); NCHW in / NCHW out."""
    B, Cl, Hl, Wl = l.shape
    Bm, Cm, Hm, Wm = m.shape
    Bs, Cs, Hs, Ws = s.shape
    assert B == Bm == Bs
    # TODO(synk): non-integer adaptive-pool / interpolate ratios (variable window
    # sizes) are not implemented; YOLO feature pyramids always use integer ratios.
    assert Hl % Hm == 0 and Wl % Wm == 0, "adaptive pooling needs integer ratio here"
    assert Hm % Hs == 0 and Wm % Ws == 0, "nearest upsample needs integer ratio here"
    rh, rw = Hl // Hm, Wl // Wm
    uh, uw = Hm // Hs, Wm // Ws
    ntaps = rh * rw
    Ct = Cl + Cm + Cs

    # ---- XLA layout glue (pure data movement, no arithmetic) ----
    # l: (B, Cl, Hm*rh, Wm*rw) -> (B, rh*rw, Cl, Hm, Wm): window taps on a leading
    # axis; the remaining (Hm, Wm) axes tile exactly like the output.
    l_t = (l.reshape(B, Cl, Hm, rh, Wm, rw)
            .transpose(0, 3, 5, 1, 2, 4)
            .reshape(B, ntaps, Cl, Hm, Wm))
    # s: nearest-neighbour replication fused into a broadcast (no transpose).
    s_t = (jnp.broadcast_to(s[:, :, :, None, :, None], (B, Cs, Hs, uh, Ws, uw))
             .reshape(B, Cs, Hm, Wm))
    # m: passed through untouched (kernel output is already NCHW).

    # Row tiling: second-to-last block dim must be 8-aligned (or the full height);
    # pick the largest such divisor of Hm that keeps the double-buffered working
    # set comfortably inside VMEM at production sizes.
    if tile_h is None:
        cands = [h for h in range(Hm, 0, -1)
                 if Hm % h == 0 and (h % 8 == 0 or h == Hm)]
        itemsize = jnp.dtype(m.dtype).itemsize
        bytes_per_row = 2 * (ntaps * Cl + Cm + Cs + Ct) * Wm * itemsize  # dbl-buffered
        tile_h = cands[-1]
        for h in cands:
            if h * bytes_per_row <= 8 * 1024 * 1024:
                tile_h = h
                break
    assert Hm % tile_h == 0 and (tile_h % 8 == 0 or tile_h == Hm)
    grid = (B, Hm // tile_h)

    return pl.pallas_call(
        functools.partial(_zoom_cat_kernel, ntaps=ntaps, cl=Cl, cm=Cm),
        out_shape=jax.ShapeDtypeStruct((B, Ct, Hm, Wm), m.dtype),
        grid=grid,
        in_specs=[
            pl.BlockSpec((1, ntaps, Cl, tile_h, Wm), lambda b, i: (b, 0, 0, i, 0)),
            pl.BlockSpec((1, Cm, tile_h, Wm), lambda b, i: (b, 0, i, 0)),
            pl.BlockSpec((1, Cs, tile_h, Wm), lambda b, i: (b, 0, i, 0)),
        ],
        out_specs=pl.BlockSpec((1, Ct, tile_h, Wm), lambda b, i: (b, 0, i, 0)),
        compiler_params=pltpu.CompilerParams(
            dimension_semantics=("parallel", "parallel")),
    )(l_t, m, s_t)


def _zoom_cat_reference(l, m, s):
    """Pure-JAX reference (matches torch semantics for integer ratios)."""
    B, Cl, Hl, Wl = l.shape
    Hm, Wm = m.shape[2:]
    rh, rw = Hl // Hm, Wl // Wm
    uh, uw = Hm // s.shape[2], Wm // s.shape[3]
    mx = jax.lax.reduce_window(l, jnp.array(-jnp.inf, l.dtype), jax.lax.max,
                               (1, 1, rh, rw), (1, 1, rh, rw), "VALID")
    av = jax.lax.reduce_window(l, jnp.array(0.0, l.dtype), jax.lax.add,
                               (1, 1, rh, rw), (1, 1, rh, rw), "VALID") / (rh * rw)
    s_up = jnp.repeat(jnp.repeat(s, uh, axis=2), uw, axis=3)
    return jnp.concatenate([mx + av, m, s_up], axis=1)


if __name__ == "__main__":
    key = jax.random.PRNGKey(0)
    kl, km, ks = jax.random.split(key, 3)
    B = 2
    l = jax.random.normal(kl, (B, 4, 32, 32), jnp.float32)   # large scale
    m = jax.random.normal(km, (B, 4, 16, 16), jnp.float32)   # target scale
    s = jax.random.normal(ks, (B, 4, 8, 8), jnp.float32)     # small scale

    y = jax.jit(zoom_cat)(l, m, s)
    jax.block_until_ready(y)
    assert y.shape == (B, 12, 16, 16), y.shape

    y_ref = _zoom_cat_reference(l, m, s)
    assert jnp.allclose(y, y_ref, atol=1e-5, rtol=1e-5), \
        float(jnp.max(jnp.abs(y - y_ref)))
    print("KERNEL_OK")
</pallas_src>

<mosaic_0001>
module attributes {stable_mosaic.version = 11 : i64} {
  func.func @_zoom_cat_kernel(%arg0: i32, %arg1: i32, %arg2: memref<1x4x4x16x16xf32, #tpu.memory_space<vmem>>, %arg3: memref<1x4x16x16xf32, #tpu.memory_space<vmem>>, %arg4: memref<1x4x16x16xf32, #tpu.memory_space<vmem>>, %arg5: memref<1x12x16x16xf32, #tpu.memory_space<vmem>>) attributes {dimension_semantics = [#tpu.dimension_semantics<parallel>, #tpu.dimension_semantics<parallel>], iteration_bounds = array<i64: 2, 1>, scalar_prefetch = 0 : i64, scratch_operands = 0 : i64, tpu.core_type = #tpu.core_type<tc>, window_params = [{transform_indices = @transform_0, window_bounds = array<i64: 1, 4, 4, 16, 16>}, {transform_indices = @transform_1, window_bounds = array<i64: 1, 4, 16, 16>}, {transform_indices = @transform_2, window_bounds = array<i64: 1, 4, 16, 16>}, {transform_indices = @transform_3, window_bounds = array<i64: 1, 12, 16, 16>}]} {
    %c0 = arith.constant 0 : index
    %c0_0 = arith.constant 0 : index
    %c0_1 = arith.constant 0 : index
    %c0_2 = arith.constant 0 : index
    %c0_3 = arith.constant 0 : index
    %0 = vector.load %arg2[%c0, %c0_0, %c0_1, %c0_2, %c0_3] : memref<1x4x4x16x16xf32, #tpu.memory_space<vmem>>, vector<1x1x4x16x16xf32>
    %1 = vector.shape_cast %0 : vector<1x1x4x16x16xf32> to vector<4x16x16xf32>
    %c0_4 = arith.constant 0 : index
    %c1 = arith.constant 1 : index
    %c0_5 = arith.constant 0 : index
    %c0_6 = arith.constant 0 : index
    %c0_7 = arith.constant 0 : index
    %2 = vector.load %arg2[%c0_4, %c1, %c0_5, %c0_6, %c0_7] : memref<1x4x4x16x16xf32, #tpu.memory_space<vmem>>, vector<1x1x4x16x16xf32>
    %3 = vector.shape_cast %2 : vector<1x1x4x16x16xf32> to vector<4x16x16xf32>
    %4 = arith.maximumf %1, %3 : vector<4x16x16xf32>
    %5 = arith.addf %1, %3 : vector<4x16x16xf32>
    %c0_8 = arith.constant 0 : index
    %c2 = arith.constant 2 : index
    %c0_9 = arith.constant 0 : index
    %c0_10 = arith.constant 0 : index
    %c0_11 = arith.constant 0 : index
    %6 = vector.load %arg2[%c0_8, %c2, %c0_9, %c0_10, %c0_11] : memref<1x4x4x16x16xf32, #tpu.memory_space<vmem>>, vector<1x1x4x16x16xf32>
    %7 = vector.shape_cast %6 : vector<1x1x4x16x16xf32> to vector<4x16x16xf32>
    %8 = arith.maximumf %4, %7 : vector<4x16x16xf32>
    %9 = arith.addf %5, %7 : vector<4x16x16xf32>
    %c0_12 = arith.constant 0 : index
    %c3 = arith.constant 3 : index
    %c0_13 = arith.constant 0 : index
    %c0_14 = arith.constant 0 : index
    %c0_15 = arith.constant 0 : index
    %10 = vector.load %arg2[%c0_12, %c3, %c0_13, %c0_14, %c0_15] : memref<1x4x4x16x16xf32, #tpu.memory_space<vmem>>, vector<1x1x4x16x16xf32>
    %11 = vector.shape_cast %10 : vector<1x1x4x16x16xf32> to vector<4x16x16xf32>
    %12 = arith.maximumf %8, %11 : vector<4x16x16xf32>
    %13 = arith.addf %9, %11 : vector<4x16x16xf32>
    %cst = arith.constant 2.500000e-01 : f32
    %14 = vector.broadcast %cst : f32 to vector<4x16x16xf32>
    %15 = arith.mulf %13, %14 : vector<4x16x16xf32>
    %16 = arith.addf %12, %15 : vector<4x16x16xf32>
    %c0_16 = arith.constant 0 : index
    %c0_17 = arith.constant 0 : index
    %c0_18 = arith.constant 0 : index
    %c0_19 = arith.constant 0 : index
    %17 = vector.load %arg5[%c0_16, %c0_17, %c0_18, %c0_19] : memref<1x12x16x16xf32, #tpu.memory_space<vmem>>, vector<1x4x16x16xf32>
    %18 = vector.shape_cast %17 : vector<1x4x16x16xf32> to vector<4x16x16xf32>
    %19 = vector.shape_cast %16 : vector<4x16x16xf32> to vector<1x4x16x16xf32>
    tpu.vector_store %arg5[%c0_16, %c0_17, %c0_18, %c0_19], %19 {strides = array<i32>} : memref<1x12x16x16xf32, #tpu.memory_space<vmem>>, vector<1x4x16x16xf32>,
    %c0_20 = arith.constant 0 : index
    %c0_21 = arith.constant 0 : index
    %c0_22 = arith.constant 0 : index
    %c0_23 = arith.constant 0 : index
    %20 = vector.load %arg3[%c0_20, %c0_21, %c0_22, %c0_23] : memref<1x4x16x16xf32, #tpu.memory_space<vmem>>, vector<1x4x16x16xf32>
    %21 = vector.shape_cast %20 : vector<1x4x16x16xf32> to vector<4x16x16xf32>
    %c0_24 = arith.constant 0 : index
    %c4 = arith.constant 4 : index
    %c0_25 = arith.constant 0 : index
    %c0_26 = arith.constant 0 : index
    %22 = vector.load %arg5[%c0_24, %c4, %c0_25, %c0_26] : memref<1x12x16x16xf32, #tpu.memory_space<vmem>>, vector<1x4x16x16xf32>
    %23 = vector.shape_cast %22 : vector<1x4x16x16xf32> to vector<4x16x16xf32>
    %24 = vector.shape_cast %21 : vector<4x16x16xf32> to vector<1x4x16x16xf32>
    tpu.vector_store %arg5[%c0_24, %c4, %c0_25, %c0_26], %24 {strides = array<i32>} : memref<1x12x16x16xf32, #tpu.memory_space<vmem>>, vector<1x4x16x16xf32>,
    %c0_27 = arith.constant 0 : index
    %c0_28 = arith.constant 0 : index
    %c0_29 = arith.constant 0 : index
    %c0_30 = arith.constant 0 : index
    %25 = vector.load %arg4[%c0_27, %c0_28, %c0_29, %c0_30] : memref<1x4x16x16xf32, #tpu.memory_space<vmem>>, vector<1x4x16x16xf32>
    %26 = vector.shape_cast %25 : vector<1x4x16x16xf32> to vector<4x16x16xf32>
    %c0_31 = arith.constant 0 : index
    %c8 = arith.constant 8 : index
    %c0_32 = arith.constant 0 : index
    %c0_33 = arith.constant 0 : index
    %27 = vector.load %arg5[%c0_31, %c8, %c0_32, %c0_33] : memref<1x12x16x16xf32, #tpu.memory_space<vmem>>, vector<1x4x16x16xf32>
    %28 = vector.shape_cast %27 : vector<1x4x16x16xf32> to vector<4x16x16xf32>
    %29 = vector.shape_cast %26 : vector<4x16x16xf32> to vector<1x4x16x16xf32>
    tpu.vector_store %arg5[%c0_31, %c8, %c0_32, %c0_33], %29 {strides = array<i32>} : memref<1x12x16x16xf32, #tpu.memory_space<vmem>>, vector<1x4x16x16xf32>,
    return
  }
  func.func @transform_0(%arg0: i32, %arg1: i32) -> (i32, i32, i32, i32, i32) {
    %c0_i32 = arith.constant 0 : i32
    %c0_i32_0 = arith.constant 0 : i32
    %c0_i32_1 = arith.constant 0 : i32
    %c0_i32_2 = arith.constant 0 : i32
    return %arg0, %c0_i32, %c0_i32_0, %arg1, %c0_i32_1 : i32, i32, i32, i32, i32
  }
  func.func @transform_1(%arg0: i32, %arg1: i32) -> (i32, i32, i32, i32) {
    %c0_i32 = arith.constant 0 : i32
    %c0_i32_0 = arith.constant 0 : i32
    %c0_i32_1 = arith.constant 0 : i32
    return %arg0, %c0_i32, %arg1, %c0_i32_0 : i32, i32, i32, i32
  }
  func.func @transform_2(%arg0: i32, %arg1: i32) -> (i32, i32, i32, i32) {
    %c0_i32 = arith.constant 0 : i32
    %c0_i32_0 = arith.constant 0 : i32
    %c0_i32_1 = arith.constant 0 : i32
    return %arg0, %c0_i32, %arg1, %c0_i32_0 : i32, i32, i32, i32
  }
  func.func @transform_3(%arg0: i32, %arg1: i32) -> (i32, i32, i32, i32) {
    %c0_i32 = arith.constant 0 : i32
    %c0_i32_0 = arith.constant 0 : i32
    %c0_i32_1 = arith.constant 0 : i32
    return %arg0, %c0_i32, %arg1, %c0_i32_0 : i32, i32, i32, i32
  }
}

</mosaic_0001>

<llo_original>
// kernel: zoom_cat.1
$region0: #{zoom_cat.1}
  #allocation0 [shape = 'u32[]', space=smem, size = 0x4, offset = 0x4, fixed_abs, tag = 'smem constant byte address 0x4 - core index']
  #allocation1 [shape = 'u32[144,128]{1,0:T(1,128)}', space=vmem, size = 0x12000, scoped, tag = 'internal scratch']
  %s0 = inlined_call_operand.vmem [shape: f32[2,4,4,16,16], index: 0, kind: input, shape index: {}]
  %s1 = inlined_call_operand.vmem [shape: f32[2,4,16,16], index: 1, kind: input, shape index: {}]
  %s2 = inlined_call_operand.vmem [shape: f32[2,4,16,16], index: 2, kind: input, shape index: {}]
  %s3 = inlined_call_operand.hbm [shape: f32[2,12,16,16], index: 3, kind: output, shape index: {}]
  %s4 = sld [smem:[#allocation0]]
  $region45: #{zoom_cat.1} parent=0
    _
  %s6 = ssub.s32 1, %s4
  %s7 = scalar_select 0, %s6, %s4
  $region1: #{zoom_cat.1} parent=0
    #allocation2 [shape = 'u8[196608]{0}', space=vmem, size = 0x30000, scoped, tag = 'output window, operand 0']
    #allocation3 [shape = 's32[2]{0}', space=sflag, size = 0x8, scoped, tag = 'scoped memory for zoom_cat.1']
    %8 = vsyncpa [#allocation3], 0
    %s9 = scalar_lea.sflag [#allocation3], 1
    %10 = vsyncpa %s9, 0
    loop: start=0, step=1, limit=4
    $region2: #{zoom_cat.1} parent=1 // loop_pre_header
      _
    $region3: #{zoom_cat.1} parent=1 // loop_header
      %s12 = sphi 0, %s16
      %p13 = scmp.ge.s32.totalorder %s12, 4
      %s19 = sphi 0, %s31
      %s20 = sphi 0, %s27
      %s21 = sphi 0, %s19
      %s22 = sphi 0, %s20
      %s23 = sphi 0, %s21
      %s24 = sphi 0, %s22
      %s36 = sphi 0, %s38
      %s39 = sphi 0, %s36
      %s40 = sphi 0, %s39
      %s56 = sphi 0, %s40
      %s64 = sphi 0, %s66
      %s67 = sphi 0, %s64
      %s68 = sphi 0, %s67
      %s84 = sphi 0, %s68
      %s92 = sphi 0, %s94
      %s95 = sphi 0, %s92
      %s96 = sphi 0, %s95
      %s112 = sphi 0, %s96
      %s120 = sphi 0, %s122
      %s123 = sphi 0, %s120
      %s124 = sphi 0, %s123
      %s140 = sphi 0, %s124
    $region4: #{zoom_cat.1} parent=1 // loop_header_branch
      %15 = sbr.rel (%p13) target = $region8
    $region5: #{zoom_cat.1} parent=1 // loop_body
      %s17 = ssub.s32 %s12, 1
      %s18 = ssub.s32 %s12, 2
      %s25 = sadd.s32 1, %s20
      %p26 = scmp.ge.s32.totalorder %s25, 1
      %s27 = scalar_select %p26, 0, %s25
      %s28 = sadd.s32 1, %s19
      %s29 = scalar_select %p26, %s28, %s19
      %p30 = scmp.ge.s32.totalorder %s29, 2
      %s31 = scalar_select %p30, 0, %s29
      %s32 = ssub.s32 %s19, %s31
      %s33 = ssub.s32 %s20, %s27
      %s34 = sor.u32 %s32, %s33
      %p35 = scmp.eq.s32.totalorder %s34, 0
      %s37 = sadd.s32 %s36, 1
      %s38 = scalar_select %p35, %s36, %s37
      %p41 = pneg %p35
      %p42 = scmp.eq.s32.totalorder %s12, 1
      %p43 = por %p41, %p42
      %p44 = scmp.ne.s32.totalorder %s36, %s39
      %p45 = scmp.eq.s32.totalorder %s12, 0
      %p46 = por %p44, %p45
      %p47 = scmp.ne.s32.totalorder %s36, %s39
      %p48 = scmp.eq.s32.totalorder %s17, 1
      %p49 = por %p47, %p48
      %p50 = scmp.ne.s32.totalorder %s39, %s40
      %p51 = scmp.eq.s32.totalorder %s17, 0
      %p52 = por %p50, %p51
      %p53 = scmp.ne.s32.totalorder %s39, %s40
      %p54 = scmp.eq.s32.totalorder %s18, 1
      %p55 = por %p53, %p54
      %p57 = scmp.ne.s32.totalorder %s40, %s56
      %p58 = scmp.eq.s32.totalorder %s18, 0
      %p59 = por %p57, %p58
      %s60 = ssub.s32 %s19, %s31
      %s61 = ssub.s32 %s20, %s27
      %s62 = sor.u32 %s60, %s61
      %p63 = scmp.eq.s32.totalorder %s62, 0
      %s65 = sadd.s32 %s64, 1
      %s66 = scalar_select %p63, %s64, %s65
      %p69 = pneg %p63
      %p70 = scmp.eq.s32.totalorder %s12, 1
      %p71 = por %p69, %p70
      %p72 = scmp.ne.s32.totalorder %s64, %s67
      %p73 = scmp.eq.s32.totalorder %s12, 0
      %p74 = por %p72, %p73
      %p75 = scmp.ne.s32.totalorder %s64, %s67
      %p76 = scmp.eq.s32.totalorder %s17, 1
      %p77 = por %p75, %p76
      %p78 = scmp.ne.s32.totalorder %s67, %s68
      %p79 = scmp.eq.s32.totalorder %s17, 0
      %p80 = por %p78, %p79
      %p81 = scmp.ne.s32.totalorder %s67, %s68
      %p82 = scmp.eq.s32.totalorder %s18, 1
      %p83 = por %p81, %p82
      %p85 = scmp.ne.s32.totalorder %s68, %s84
      %p86 = scmp.eq.s32.totalorder %s18, 0
      %p87 = por %p85, %p86
      %s88 = ssub.s32 %s19, %s31
      %s89 = ssub.s32 %s20, %s27
      %s90 = sor.u32 %s88, %s89
      %p91 = scmp.eq.s32.totalorder %s90, 0
      %s93 = sadd.s32 %s92, 1
      %s94 = scalar_select %p91, %s92, %s93
      %p97 = pneg %p91
      %p98 = scmp.eq.s32.totalorder %s12, 1
      %p99 = por %p97, %p98
      %p100 = scmp.ne.s32.totalorder %s92, %s95
      %p101 = scmp.eq.s32.totalorder %s12, 0
      %p102 = por %p100, %p101
      %p103 = scmp.ne.s32.totalorder %s92, %s95
      %p104 = scmp.eq.s32.totalorder %s17, 1
      %p105 = por %p103, %p104
      %p106 = scmp.ne.s32.totalorder %s95, %s96
      %p107 = scmp.eq.s32.totalorder %s17, 0
      %p108 = por %p106, %p107
      %p109 = scmp.ne.s32.totalorder %s95, %s96
      %p110 = scmp.eq.s32.totalorder %s18, 1
      %p111 = por %p109, %p110
      %p113 = scmp.ne.s32.totalorder %s96, %s112
      %p114 = scmp.eq.s32.totalorder %s18, 0
      %p115 = por %p113, %p114
      %s116 = ssub.s32 %s19, %s31
      %s117 = ssub.s32 %s20, %s27
      %s118 = sor.u32 %s116, %s117
      %p119 = scmp.eq.s32.totalorder %s118, 0
      %s121 = sadd.s32 %s120, 1
      %s122 = scalar_select %p119, %s120, %s121
      %p125 = pneg %p119
      %p126 = scmp.eq.s32.totalorder %s12, 1
      %p127 = por %p125, %p126
      %p128 = scmp.ne.s32.totalorder %s120, %s123
      %p129 = scmp.eq.s32.totalorder %s12, 0
      %p130 = por %p128, %p129
      %p131 = scmp.ne.s32.totalorder %s120, %s123
      %p132 = scmp.eq.s32.totalorder %s17, 1
      %p133 = por %p131, %p132
      %p134 = scmp.ne.s32.totalorder %s123, %s124
      %p135 = scmp.eq.s32.totalorder %s17, 0
      %p136 = por %p134, %p135
      %p137 = scmp.ne.s32.totalorder %s123, %s124
      %p138 = scmp.eq.s32.totalorder %s18, 1
      %p139 = por %p137, %p138
      %p141 = scmp.ne.s32.totalorder %s124, %s140
      %p142 = scmp.eq.s32.totalorder %s18, 0
      %p143 = por %p141, %p142
      %p144 = scmp.le.s32.totalorder 1, %s12
      %p145 = scmp.lt.s32.totalorder %s12, 3
      %p146 = pnand %p144, %p145
      %p147 = pneg %p146
      // Predicated region
      $region9: #{zoom_cat.1} parent=5 // pred_check
        _
      $region10: #{zoom_cat.1} parent=5 // pred_check_branch
        %149 = sbr.rel (%p146) target = $region12
      $region11: #{zoom_cat.1} parent=5 // pred_region
        %s150 = ssub.s32 %s12, 1
      $region12: #{zoom_cat.1} parent=5 // pred_fallthru
        _
      %p151 = scmp.lt.s32.totalorder %s12, 2
      // Predicated region
      $region13: #{zoom_cat.1} parent=5 // pred_check
        %p152 = pneg %p151
      $region14: #{zoom_cat.1} parent=5 // pred_check_branch
        %154 = sbr.rel (%p152) target = $region16
      $region15: #{zoom_cat.1} parent=5 // pred_region
        // Predicated region
        $region17: #{zoom_cat.1} parent=15 // pred_check
          %p155 = pneg %p46
        $region18: #{zoom_cat.1} parent=15 // pred_check_branch
          %157 = sbr.rel (%p155) target = $region20
        $region19: #{zoom_cat.1} parent=15 // pred_region
          %s158 = smul.u32 2, %s20
          %p159 = scmp.lt.s32.totalorder %s19, 1
          %s160 = scalar_select %p159, %s19, 1
          %p161 = scmp.lt.s32.totalorder %s158, 1
          %s162 = scalar_select %p161, %s158, 1
          %s163 = smul.addr %s160, 32
          %s164 = sadd.s32 %s162, %s163
          %s165 = smul.addr %s164, 8
          %s166 = scalar_lea.vmem %s0, %s165
          %s167 = smul.u32 2, %s20
        $region20: #{zoom_cat.1} parent=15 // pred_fallthru
          _
        // Predicated region
        $region21: #{zoom_cat.1} parent=15 // pred_check
          %p168 = pneg %p74
        $region22: #{zoom_cat.1} parent=15 // pred_check_branch
          %170 = sbr.rel (%p168) target = $region24
        $region23: #{zoom_cat.1} parent=15 // pred_region
          %s171 = smul.u32 2, %s20
          %p172 = scmp.lt.s32.totalorder %s19, 1
          %s173 = scalar_select %p172, %s19, 1
          %p174 = scmp.lt.s32.totalorder %s171, 1
          %s175 = scalar_select %p174, %s171, 1
          %s176 = smul.addr %s173, 8
          %s177 = sadd.s32 %s175, %s176
          %s178 = smul.addr %s177, 8
          %s179 = scalar_lea.vmem %s1, %s178
          %s180 = smul.u32 2, %s20
        $region24: #{zoom_cat.1} parent=15 // pred_fallthru
          _
        // Predicated region
        $region25: #{zoom_cat.1} parent=15 // pred_check
          %p181 = pneg %p102
        $region26: #{zoom_cat.1} parent=15 // pred_check_branch
          %183 = sbr.rel (%p181) target = $region28
        $region27: #{zoom_cat.1} parent=15 // pred_region
          %s184 = smul.u32 2, %s20
          %p185 = scmp.lt.s32.totalorder %s19, 1
          %s186 = scalar_select %p185, %s19, 1
          %p187 = scmp.lt.s32.totalorder %s184, 1
          %s188 = scalar_select %p187, %s184, 1
          %s189 = smul.addr %s186, 8
          %s190 = sadd.s32 %s188, %s189
          %s191 = smul.addr %s190, 8
          %s192 = scalar_lea.vmem %s2, %s191
          %s193 = smul.u32 2, %s20
        $region28: #{zoom_cat.1} parent=15 // pred_fallthru
          _
      $region16: #{zoom_cat.1} parent=5 // pred_fallthru
        _
      %p194 = scmp.le.s32.totalorder 1, %s12
      %p195 = scmp.lt.s32.totalorder %s12, 3
      %p196 = pnand %p194, %p195
      %p197 = pneg %p196
      // Predicated region
      $region29: #{zoom_cat.1} parent=5 // pred_check
        _
      $region30: #{zoom_cat.1} parent=5 // pred_check_branch
        %199 = sbr.rel (%p196) target = $region32
      $region31: #{zoom_cat.1} parent=5 // pred_region
        %s200 = ssub.s32 %s12, 1
        %s201 = smul.u32 2, %s22
        %p202 = scmp.lt.s32.totalorder %s21, 1
        %s203 = scalar_select %p202, %s21, 1
        %p204 = scmp.lt.s32.totalorder %s201, 1
        %s205 = scalar_select %p204, %s201, 1
        %s206 = smul.addr %s203, 32
        %s207 = sadd.s32 %s205, %s206
        %s208 = smul.addr %s207, 8
        %s209 = scalar_lea.vmem %s0, %s208
        %p210 = pneg %p52
        %p211 = pneg %p49
        %s212 = smul.u32 2, %s22
        %p213 = scmp.lt.s32.totalorder %s21, 1
        %s214 = scalar_select %p213, %s21, 1
        %p215 = scmp.lt.s32.totalorder %s212, 1
        %s216 = scalar_select %p215, %s212, 1
        %s217 = smul.addr %s214, 8
        %s218 = sadd.s32 %s216, %s217
        %s219 = smul.addr %s218, 8
        %s220 = scalar_lea.vmem %s1, %s219
        %p221 = pneg %p80
        %p222 = pneg %p77
        %s223 = smul.u32 2, %s22
        %p224 = scmp.lt.s32.totalorder %s21, 1
        %s225 = scalar_select %p224, %s21, 1
        %p226 = scmp.lt.s32.totalorder %s223, 1
        %s227 = scalar_select %p226, %s223, 1
        %s228 = smul.addr %s225, 8
        %s229 = sadd.s32 %s227, %s228
        %s230 = smul.addr %s229, 8
        %s231 = scalar_lea.vmem %s2, %s230
        %p232 = pneg %p108
        %p233 = pneg %p105
        %p234 = pneg %p136
        %p235 = pneg %p133
        %s236 = sand.u32 %s123, 1
        %s237 = scalar_lea.sflag [#allocation3], %s236
        %s238 = sand.u32 %s123, 1
        %s239 = smul.addr %s238, 192
        %s240 = scalar_lea.vmem [#allocation2], %s239
        %s241 = smul.u32 2, %s22
        %p242 = scmp.lt.s32.totalorder %s21, 1
        %s243 = scalar_select %p242, %s21, 1
        %p244 = scmp.lt.s32.totalorder %s241, 1
        %s245 = scalar_select %p244, %s241, 1
        %s246 = smul.addr %s243, 32
        %s247 = sadd.s32 %s245, %s246
        %s248 = smul.addr %s247, 8
        %s249 = scalar_lea.vmem %s0, %s248
        %s250 = smul.u32 2, %s22
        %s251 = smul.u32 2, %s22
        %p252 = scmp.lt.s32.totalorder %s21, 1
        %s253 = scalar_select %p252, %s21, 1
        %p254 = scmp.lt.s32.totalorder %s251, 1
        %s255 = scalar_select %p254, %s251, 1
        %s256 = smul.addr %s253, 8
        %s257 = sadd.s32 %s255, %s256
        %s258 = smul.addr %s257, 8
        %s259 = scalar_lea.vmem %s1, %s258
        %s260 = smul.u32 2, %s22
        %s261 = smul.u32 2, %s22
        %p262 = scmp.lt.s32.totalorder %s21, 1
        %s263 = scalar_select %p262, %s21, 1
        %p264 = scmp.lt.s32.totalorder %s261, 1
        %s265 = scalar_select %p264, %s261, 1
        %s266 = smul.addr %s263, 8
        %s267 = sadd.s32 %s265, %s266
        %s268 = smul.addr %s267, 8
        %s269 = scalar_lea.vmem %s2, %s268
        %s270 = smul.u32 2, %s22
        %s271 = smul.u32 2, %s22
        %v272 = vld [vmem:[%s249] sm:$0xff]
        %v273 = vld [vmem:[%s249 + $0x8] sm:$0xff]
        %v274 = vld [vmem:[%s249 + $0x10] sm:$0xff]
        %v275 = vld [vmem:[%s249 + $0x18] sm:$0xff]
        %v276 = vld [vmem:[%s249 + $0x20] sm:$0xff]
        %v277 = vld [vmem:[%s249 + $0x28] sm:$0xff]
        %v278 = vld [vmem:[%s249 + $0x30] sm:$0xff]
        %v279 = vld [vmem:[%s249 + $0x38] sm:$0xff]
        %s280 = scalar_lea.vmem %s249, 64
        %v281 = vld [vmem:[%s280] sm:$0xff]
        %v282 = vld [vmem:[%s280 + $0x8] sm:$0xff]
        %v283 = vld [vmem:[%s280 + $0x10] sm:$0xff]
        %v284 = vld [vmem:[%s280 + $0x18] sm:$0xff]
        %v285 = vld [vmem:[%s280 + $0x20] sm:$0xff]
        %v286 = vld [vmem:[%s280 + $0x28] sm:$0xff]
        %v287 = vld [vmem:[%s280 + $0x30] sm:$0xff]
        %v288 = vld [vmem:[%s280 + $0x38] sm:$0xff]
        %v289 = vmax.f32 %v272, %v281
        %v290 = vmax.f32 %v273, %v282
        %v291 = vmax.f32 %v274, %v283
        %v292 = vmax.f32 %v275, %v284
        %v293 = vmax.f32 %v276, %v285
        %v294 = vmax.f32 %v277, %v286
        %v295 = vmax.f32 %v278, %v287
        %v296 = vmax.f32 %v279, %v288
        %v297 = vadd.f32 %v272, %v281
        %v298 = vadd.f32 %v273, %v282
        %v299 = vadd.f32 %v274, %v283
        %v300 = vadd.f32 %v275, %v284
        %v301 = vadd.f32 %v276, %v285
        %v302 = vadd.f32 %v277, %v286
        %v303 = vadd.f32 %v278, %v287
        %v304 = vadd.f32 %v279, %v288
        %s305 = scalar_lea.vmem %s249, 128
        %v306 = vld [vmem:[%s305] sm:$0xff]
        %v307 = vld [vmem:[%s305 + $0x8] sm:$0xff]
        %v308 = vld [vmem:[%s305 + $0x10] sm:$0xff]
        %v309 = vld [vmem:[%s305 + $0x18] sm:$0xff]
        %v310 = vld [vmem:[%s305 + $0x20] sm:$0xff]
        %v311 = vld [vmem:[%s305 + $0x28] sm:$0xff]
        %v312 = vld [vmem:[%s305 + $0x30] sm:$0xff]
        %v313 = vld [vmem:[%s305 + $0x38] sm:$0xff]
        %v314 = vmax.f32 %v289, %v306
        %v315 = vmax.f32 %v290, %v307
        %v316 = vmax.f32 %v291, %v308
        %v317 = vmax.f32 %v292, %v309
        %v318 = vmax.f32 %v293, %v310
        %v319 = vmax.f32 %v294, %v311
        %v320 = vmax.f32 %v295, %v312
        %v321 = vmax.f32 %v296, %v313
        %v322 = vadd.f32 %v297, %v306
        %v323 = vadd.f32 %v298, %v307
        %v324 = vadd.f32 %v299, %v308
        %v325 = vadd.f32 %v300, %v309
        %v326 = vadd.f32 %v301, %v310
        %v327 = vadd.f32 %v302, %v311
        %v328 = vadd.f32 %v303, %v312
        %v329 = vadd.f32 %v304, %v313
        %s330 = scalar_lea.vmem %s249, 192
        %v331 = vld [vmem:[%s330] sm:$0xff]
        %v332 = vld [vmem:[%s330 + $0x8] sm:$0xff]
        %v333 = vld [vmem:[%s330 + $0x10] sm:$0xff]
        %v334 = vld [vmem:[%s330 + $0x18] sm:$0xff]
        %v335 = vld [vmem:[%s330 + $0x20] sm:$0xff]
        %v336 = vld [vmem:[%s330 + $0x28] sm:$0xff]
        %v337 = vld [vmem:[%s330 + $0x30] sm:$0xff]
        %v338 = vld [vmem:[%s330 + $0x38] sm:$0xff]
        %v339 = vmax.f32 %v314, %v331
        %v340 = vmax.f32 %v315, %v332
        %v341 = vmax.f32 %v316, %v333
        %v342 = vmax.f32 %v317, %v334
        %v343 = vmax.f32 %v318, %v335
        %v344 = vmax.f32 %v319, %v336
        %v345 = vmax.f32 %v320, %v337
        %v346 = vmax.f32 %v321, %v338
        %v347 = vadd.f32 %v322, %v331
        %v348 = vadd.f32 %v323, %v332
        %v349 = vadd.f32 %v324, %v333
        %v350 = vadd.f32 %v325, %v334
        %v351 = vadd.f32 %v326, %v335
        %v352 = vadd.f32 %v327, %v336
        %v353 = vadd.f32 %v328, %v337
        %v354 = vadd.f32 %v329, %v338
        %v355 = vmul.f32 %v347, 0.25
        %v356 = vmul.f32 %v348, 0.25
        %v357 = vmul.f32 %v349, 0.25
        %v358 = vmul.f32 %v350, 0.25
        %v359 = vmul.f32 %v351, 0.25
        %v360 = vmul.f32 %v352, 0.25
        %v361 = vmul.f32 %v353, 0.25
        %v362 = vmul.f32 %v354, 0.25
        %v363 = vadd.f32 %v339, %v355
        %v364 = vadd.f32 %v340, %v356
        %v365 = vadd.f32 %v341, %v357
        %v366 = vadd.f32 %v342, %v358
        %v367 = vadd.f32 %v343, %v359
        %v368 = vadd.f32 %v344, %v360
        %v369 = vadd.f32 %v345, %v361
        %v370 = vadd.f32 %v346, %v362
        %vm371 = vcmask 130048
        %372 = vst.msk [vmem:[%s240] sm:$0xff] %vm371, %v363
        %373 = vst.msk [vmem:[%s240 + $0x8] sm:$0xff] %vm371, %v364
        %374 = vst.msk [vmem:[%s240 + $0x10] sm:$0xff] %vm371, %v365
        %375 = vst.msk [vmem:[%s240 + $0x18] sm:$0xff] %vm371, %v366
        %376 = vst.msk [vmem:[%s240 + $0x20] sm:$0xff] %vm371, %v367
        %377 = vst.msk [vmem:[%s240 + $0x28] sm:$0xff] %vm371, %v368
        %378 = vst.msk [vmem:[%s240 + $0x30] sm:$0xff] %vm371, %v369
        %379 = vst.msk [vmem:[%s240 + $0x38] sm:$0xff] %vm371, %v370
        %v380 = vld [vmem:[%s259] sm:$0xff]
        %v381 = vld [vmem:[%s259 + $0x8] sm:$0xff]
        %v382 = vld [vmem:[%s259 + $0x10] sm:$0xff]
        %v383 = vld [vmem:[%s259 + $0x18] sm:$0xff]
        %v384 = vld [vmem:[%s259 + $0x20] sm:$0xff]
        %v385 = vld [vmem:[%s259 + $0x28] sm:$0xff]
        %v386 = vld [vmem:[%s259 + $0x30] sm:$0xff]
        %v387 = vld [vmem:[%s259 + $0x38] sm:$0xff]
        %s388 = scalar_lea.vmem %s240, 64 [#allocation2]
        %389 = vst.msk [vmem:[%s388] sm:$0xff] %vm371, %v380
        %390 = vst.msk [vmem:[%s388 + $0x8] sm:$0xff] %vm371, %v381
        %391 = vst.msk [vmem:[%s388 + $0x10] sm:$0xff] %vm371, %v382
        %392 = vst.msk [vmem:[%s388 + $0x18] sm:$0xff] %vm371, %v383
        %393 = vst.msk [vmem:[%s388 + $0x20] sm:$0xff] %vm371, %v384
        %394 = vst.msk [vmem:[%s388 + $0x28] sm:$0xff] %vm371, %v385
        %395 = vst.msk [vmem:[%s388 + $0x30] sm:$0xff] %vm371, %v386
        %396 = vst.msk [vmem:[%s388 + $0x38] sm:$0xff] %vm371, %v387
        %v397 = vld [vmem:[%s269] sm:$0xff]
        %v398 = vld [vmem:[%s269 + $0x8] sm:$0xff]
        %v399 = vld [vmem:[%s269 + $0x10] sm:$0xff]
        %v400 = vld [vmem:[%s269 + $0x18] sm:$0xff]
        %v401 = vld [vmem:[%s269 + $0x20] sm:$0xff]
        %v402 = vld [vmem:[%s269 + $0x28] sm:$0xff]
        %v403 = vld [vmem:[%s269 + $0x30] sm:$0xff]
        %v404 = vld [vmem:[%s269 + $0x38] sm:$0xff]
        %s405 = scalar_lea.vmem %s240, 128 [#allocation2]
        %406 = vst.msk [vmem:[%s405] sm:$0xff] %vm371, %v397
        %407 = vst.msk [vmem:[%s405 + $0x8] sm:$0xff] %vm371, %v398
        %408 = vst.msk [vmem:[%s405 + $0x10] sm:$0xff] %vm371, %v399
        %409 = vst.msk [vmem:[%s405 + $0x18] sm:$0xff] %vm371, %v400
        %410 = vst.msk [vmem:[%s405 + $0x20] sm:$0xff] %vm371, %v401
        %411 = vst.msk [vmem:[%s405 + $0x28] sm:$0xff] %vm371, %v402
        %412 = vst.msk [vmem:[%s405 + $0x30] sm:$0xff] %vm371, %v403
        %413 = vst.msk [vmem:[%s405 + $0x38] sm:$0xff] %vm371, %v404
        %s414 = sand.u32 %s123, 1
        %s415 = scalar_lea.sflag [#allocation3], %s414
        %s416 = sand.u32 %s123, 1
        %s417 = smul.addr %s416, 192
        %s418 = scalar_lea.vmem [#allocation2], %s417
        // Predicated region
        $region33: #{zoom_cat.1} parent=31 // pred_check
          %p419 = pneg %p133
        $region34: #{zoom_cat.1} parent=31 // pred_check_branch
          %421 = sbr.rel (%p419) target = $region36
        $region35: #{zoom_cat.1} parent=31 // pred_region
          %s422 = smul.u32 2, %s22
          %s424 = ssub.s32 3072, 3072
          %425 = vsyncadd %s415, %s424
          %s426 = smul.addr %s21, 24
          %s427 = sadd.s32 %s422, %s426
          %s428 = smul.addr %s427, 128
          %s429 = scalar_lea.hbm %s3, %s428
          %s430 = sshll.u32 %s418, 4
          %s431 = int_to_ptr.vmem [resolvable:$true] %s430
          %436 = dma.vmem_to_hbm [thread:$0]  %s431, 3072, %s429, %s415, 128, 128, 8
        $region36: #{zoom_cat.1} parent=31 // pred_fallthru
          _
      $region32: #{zoom_cat.1} parent=5 // pred_fallthru
        _
      %p437 = scmp.le.s32.totalorder 2, %s12
      // Predicated region
      $region37: #{zoom_cat.1} parent=5 // pred_check
        %p438 = pneg %p437
      $region38: #{zoom_cat.1} parent=5 // pred_check_branch
        %440 = sbr.rel (%p438) target = $region40
      $region39: #{zoom_cat.1} parent=5 // pred_region
        %s441 = ssub.s32 %s12, 2
        // Predicated region
        $region41: #{zoom_cat.1} parent=39 // pred_check
          %p442 = pneg %p139
        $region42: #{zoom_cat.1} parent=39 // pred_check_branch
          %444 = sbr.rel (%p442) target = $region44
        $region43: #{zoom_cat.1} parent=39 // pred_region
          %s445 = sand.u32 %s124, 1
          %s446 = scalar_lea.sflag [#allocation3], %s445
          %s447 = sand.u32 %s124, 1
          %s448 = smul.addr %s447, 192
          %s449 = scalar_lea.vmem [#allocation2], %s448
          %450 = dma.done %s446, 3072
        $region44: #{zoom_cat.1} parent=39 // pred_fallthru
          _
      $region40: #{zoom_cat.1} parent=5 // pred_fallthru
        _
    $region6: #{zoom_cat.1} parent=1 // loop_footer
      %s16 = sadd.s32 1, %s12
    $region7: #{zoom_cat.1} parent=1 // loop_footer_branch
      %11 = sbr.rel target = $region3
    $region8: #{zoom_cat.1} parent=1 // loop_exit
      _
    %451 = vsyncpa [#allocation3], 1
    %s452 = scalar_lea.sflag [#allocation3], 1
    %453 = vsyncpa %s452, 1

</llo_original>
